<compile_context>
chip_gen: v7x
topology: tpu7x:2x2x1
jax: 0.10.0
libtpu: 0.0.40
codegen_flags: <defaults>
</compile_context>

<pallas_src>
import functools

import jax
import jax.numpy as jnp
from jax.experimental import pallas as pl
from jax.experimental.pallas import tpu as pltpu

LN_EPS = 1e-5  # torch.nn.LayerNorm default


def _round_up(x: int, n: int) -> int:
    return ((x + n - 1) // n) * n


# ----------------------------------------------------------------------------
# Pallas kernel: LayerNorm(optional) + Linear + ReLU + Linear + residual
# ----------------------------------------------------------------------------
def _adapter_kernel(*refs, add_layernorm: bool, d_true: int):
    if add_layernorm:
        x_ref, g_ref, beta_ref, w1_ref, b1_ref, w2_ref, b2_ref, o_ref = refs
    else:
        x_ref, w1_ref, b1_ref, w2_ref, b2_ref, o_ref = refs
        g_ref = beta_ref = None

    x = x_ref[...].astype(jnp.float32)                      # (tm, Dp)

    if add_layernorm:
        # One-pass statistics over the TRUE feature width (padded lanes are zero,
        # so the sums only see real features; divide by d_true, not Dp).
        inv_d = jnp.float32(1.0 / d_true)
        mean = jnp.sum(x, axis=-1, keepdims=True) * inv_d
        mean_sq = jnp.sum(x * x, axis=-1, keepdims=True) * inv_d
        var = mean_sq - mean * mean
        h = (x - mean) * jax.lax.rsqrt(var + LN_EPS)
        h = h * g_ref[...] + beta_ref[...]                   # padded gamma/beta are 0
    else:
        h = x

    # down-projection + ReLU (bf16 operands, f32 accumulation on the MXU)
    h1 = jnp.dot(h.astype(jnp.bfloat16), w1_ref[...],
                 preferred_element_type=jnp.float32) + b1_ref[...]
    h1 = jnp.maximum(h1, 0.0)
    # up-projection
    y = jnp.dot(h1.astype(jnp.bfloat16), w2_ref[...],
                preferred_element_type=jnp.float32) + b2_ref[...]

    # residual connection (adapter(x) + x) in f32
    o_ref[...] = (y + x).astype(o_ref.dtype)


def adapter_forward(x_bsd, params, *, add_layernorm: bool, tm: int = 256):
    """Runs the adapter (with residual) on a (b, s, d) tensor via Pallas."""
    b, s, d = x_bsd.shape
    m = b * s

    gamma, beta, w1, b1, w2, b2 = params
    h = w1.shape[1]

    # Lane-dense padding (multiples of 128) and sublane-friendly row tiling.
    d_pad = _round_up(d, 128)
    h_pad = _round_up(h, 128)
    tm = min(tm, _round_up(m, 8))          # tm multiple of 8; cap VMEM per tile
    m_pad = _round_up(m, tm)

    x2d = x_bsd.reshape(m, d)
    x2d = jnp.pad(x2d, ((0, m_pad - m), (0, d_pad - d)))

    # Zero-pad weights/biases; weights in bf16 for the MXU (halves weight DMA too).
    w1p = jnp.pad(w1, ((0, d_pad - d), (0, h_pad - h))).astype(jnp.bfloat16)
    w2p = jnp.pad(w2, ((0, h_pad - h), (0, d_pad - d))).astype(jnp.bfloat16)
    b1p = jnp.pad(b1, ((0, 0), (0, h_pad - h))).astype(jnp.float32)
    b2p = jnp.pad(b2, ((0, 0), (0, d_pad - d))).astype(jnp.float32)

    kernel = functools.partial(_adapter_kernel,
                               add_layernorm=add_layernorm, d_true=d)

    row_spec = pl.BlockSpec((tm, d_pad), lambda i: (i, 0))      # tiled over rows
    resident = lambda shape: pl.BlockSpec(shape, lambda i: (0, 0))  # stays in VMEM

    in_specs = [row_spec]
    operands = [x2d]
    if add_layernorm:
        gp = jnp.pad(gamma, ((0, 0), (0, d_pad - d))).astype(jnp.float32)
        bp = jnp.pad(beta, ((0, 0), (0, d_pad - d))).astype(jnp.float32)
        in_specs += [resident((1, d_pad)), resident((1, d_pad))]
        operands += [gp, bp]
    in_specs += [resident((d_pad, h_pad)), resident((1, h_pad)),
                 resident((h_pad, d_pad)), resident((1, d_pad))]
    operands += [w1p, b1p, w2p, b2p]

    cost = pl.CostEstimate(
        flops=4 * m * d * h,                      # two matmuls
        transcendentals=0,
        bytes_accessed=8 * m * d + 4 * d * h,     # f32 x in/out + bf16 weights
    )

    out = pl.pallas_call(
        kernel,
        out_shape=jax.ShapeDtypeStruct((m_pad, d_pad), x_bsd.dtype),
        grid_spec=pltpu.PrefetchScalarGridSpec(
            num_scalar_prefetch=0,
            grid=(m_pad // tm,),
            in_specs=in_specs,
            out_specs=pl.BlockSpec((tm, d_pad), lambda i: (i, 0)),
        ),
        compiler_params=pltpu.CompilerParams(
            dimension_semantics=("parallel",)),   # row tiles independent -> megacore
        cost_estimate=cost,
    )(*operands)

    return out[:m, :d].reshape(b, s, d)


# ----------------------------------------------------------------------------
# Parameter construction (matches Adapter.init_weights: normal(std=1e-3) clamped
# to +-2e-3 for Linear weight & bias; LayerNorm gamma=1, beta=0).
# ----------------------------------------------------------------------------
def init_adapter_params(key, dim, downsample_factor):
    h = dim // downsample_factor
    std = 0.001
    k1, k2, k3, k4 = jax.random.split(key, 4)

    def trunc(k, shape):
        v = std * jax.random.normal(k, shape, dtype=jnp.float32)
        return jnp.clip(v, -2 * std, 2 * std)

    gamma = jnp.ones((1, dim), jnp.float32)
    beta = jnp.zeros((1, dim), jnp.float32)
    w1 = trunc(k1, (dim, h))          # stored (in, out)
    b1 = trunc(k2, (1, h))
    w2 = trunc(k3, (h, dim))
    b2 = trunc(k4, (1, dim))
    return (gamma, beta, w1, b1, w2, b2)


# ----------------------------------------------------------------------------
# Stand-in attn_block (external dependency injected into AdapterWrapper).
# Simple single-head self-attention in plain JAX; returns a tuple like HF blocks.
# ----------------------------------------------------------------------------
def make_attn_block(key, dim):
    kq, kk, kv, ko = jax.random.split(key, 4)
    scale = 0.02
    wq = scale * jax.random.normal(kq, (dim, dim), jnp.float32)
    wk = scale * jax.random.normal(kk, (dim, dim), jnp.float32)
    wv = scale * jax.random.normal(kv, (dim, dim), jnp.float32)
    wo = scale * jax.random.normal(ko, (dim, dim), jnp.float32)

    def attn_block(x):
        q = x @ wq
        k = x @ wk
        v = x @ wv
        scores = jnp.einsum("bqd,bkd->bqk", q, k) / jnp.sqrt(jnp.float32(dim))
        a = jax.nn.softmax(scores, axis=-1)
        out = jnp.einsum("bqk,bkd->bqd", a, v) @ wo
        return (out, a)  # (attn_output, attention_weights)

    return attn_block


# ----------------------------------------------------------------------------
# AdapterWrapper.forward
# ----------------------------------------------------------------------------
def adapter_wrapper_forward(x, attn_block, adapter_params, *, add_layernorm):
    attn_outputs = attn_block(x)
    attn_output, outputs = attn_outputs[0], attn_outputs[1:]
    hidden_states = adapter_forward(attn_output, adapter_params,
                                    add_layernorm=add_layernorm)
    return (hidden_states,) + outputs


# ----------------------------------------------------------------------------
# Pure-JAX (f32) reference for correctness checking
# ----------------------------------------------------------------------------
def adapter_ref(x_bsd, params, *, add_layernorm):
    gamma, beta, w1, b1, w2, b2 = params
    h = x_bsd
    if add_layernorm:
        mean = jnp.mean(h, axis=-1, keepdims=True)
        var = jnp.mean((h - mean) ** 2, axis=-1, keepdims=True)
        h = (h - mean) * jax.lax.rsqrt(var + LN_EPS) * gamma[0] + beta[0]
    h = jnp.maximum(h @ w1 + b1[0], 0.0)
    y = h @ w2 + b2[0]
    return y + x_bsd


if __name__ == "__main__":
    B, S, D = 2, 8, 32          # batch, seq, hidden
    DOWNSAMPLE = 4              # adapter bottleneck = D // 4 = 8
    ADD_LN = True

    key = jax.random.PRNGKey(0)
    kx, kadapt, kattn = jax.random.split(key, 3)

    x = jax.random.normal(kx, (B, S, D), dtype=jnp.float32)
    adapter_params = init_adapter_params(kadapt, D, DOWNSAMPLE)
    attn_block = make_attn_block(kattn, D)

    hidden, attn_weights = adapter_wrapper_forward(
        x, attn_block, adapter_params, add_layernorm=ADD_LN)
    hidden = jax.block_until_ready(hidden)

    # correctness check of the Pallas adapter against a pure-JAX f32 reference
    # (bf16 matmul operands -> use a slightly loosened tolerance)
    attn_out = attn_block(x)[0]
    ref = adapter_ref(attn_out, adapter_params, add_layernorm=ADD_LN)
    assert hidden.shape == (B, S, D)
    assert attn_weights.shape == (B, S, S)
    assert jnp.max(jnp.abs(hidden - ref)) < 5e-3

    # also exercise the add_layernorm=False path (gamma/beta not DMA'd)
    out_noln = adapter_forward(attn_out, adapter_params, add_layernorm=False)
    out_noln = jax.block_until_ready(out_noln)
    ref_noln = adapter_ref(attn_out, adapter_params, add_layernorm=False)
    assert jnp.max(jnp.abs(out_noln - ref_noln)) < 5e-3

    print("KERNEL_OK")
</pallas_src>

<mosaic_0001>
module attributes {stable_mosaic.version = 11 : i64} {
  func.func @_adapter_kernel(%arg0: i32, %arg1: memref<16x128xf32, #tpu.memory_space<vmem>>, %arg2: memref<1x128xf32, #tpu.memory_space<vmem>>, %arg3: memref<1x128xf32, #tpu.memory_space<vmem>>, %arg4: memref<128x128xbf16, #tpu.memory_space<vmem>>, %arg5: memref<1x128xf32, #tpu.memory_space<vmem>>, %arg6: memref<128x128xbf16, #tpu.memory_space<vmem>>, %arg7: memref<1x128xf32, #tpu.memory_space<vmem>>, %arg8: memref<16x128xf32, #tpu.memory_space<vmem>>) attributes {dimension_semantics = [#tpu.dimension_semantics<parallel>], iteration_bounds = array<i64: 1>, scalar_prefetch = 0 : i64, scratch_operands = 0 : i64, tpu.core_type = #tpu.core_type<tc>, window_params = [{transform_indices = @transform_0, window_bounds = array<i64: 16, 128>}, {pipeline_mode = #tpu.pipeline_mode<synchronous>, transform_indices = @transform_1, window_bounds = array<i64: 1, 128>}, {pipeline_mode = #tpu.pipeline_mode<synchronous>, transform_indices = @transform_2, window_bounds = array<i64: 1, 128>}, {pipeline_mode = #tpu.pipeline_mode<synchronous>, transform_indices = @transform_3, window_bounds = array<i64: 128, 128>}, {pipeline_mode = #tpu.pipeline_mode<synchronous>, transform_indices = @transform_4, window_bounds = array<i64: 1, 128>}, {pipeline_mode = #tpu.pipeline_mode<synchronous>, transform_indices = @transform_5, window_bounds = array<i64: 128, 128>}, {pipeline_mode = #tpu.pipeline_mode<synchronous>, transform_indices = @transform_6, window_bounds = array<i64: 1, 128>}, {transform_indices = @transform_7, window_bounds = array<i64: 16, 128>}]} {
    %c0 = arith.constant 0 : index
    %c0_0 = arith.constant 0 : index
    %0 = vector.load %arg1[%c0, %c0_0] : memref<16x128xf32, #tpu.memory_space<vmem>>, vector<16x128xf32>
    %cst = arith.constant dense<0.000000e+00> : vector<16xf32>
    %1 = vector.multi_reduction <add>, %0, %cst [1] : vector<16x128xf32> to vector<16xf32>
    %2 = vector.shape_cast %1 : vector<16xf32> to vector<16x1xf32>
    %cst_1 = arith.constant 3.125000e-02 : f32
    %3 = vector.broadcast %cst_1 : f32 to vector<16x1xf32>
    %4 = arith.mulf %2, %3 : vector<16x1xf32>
    %5 = arith.mulf %0, %0 : vector<16x128xf32>
    %cst_2 = arith.constant dense<0.000000e+00> : vector<16xf32>
    %6 = vector.multi_reduction <add>, %5, %cst_2 [1] : vector<16x128xf32> to vector<16xf32>
    %7 = vector.shape_cast %6 : vector<16xf32> to vector<16x1xf32>
    %cst_3 = arith.constant 3.125000e-02 : f32
    %8 = vector.broadcast %cst_3 : f32 to vector<16x1xf32>
    %9 = arith.mulf %7, %8 : vector<16x1xf32>
    %10 = arith.mulf %4, %4 : vector<16x1xf32>
    %11 = arith.subf %9, %10 : vector<16x1xf32>
    %12 = vector.broadcast %4 : vector<16x1xf32> to vector<16x128xf32>
    %13 = arith.subf %0, %12 : vector<16x128xf32>
    %cst_4 = arith.constant 9.99999974E-6 : f32
    %14 = vector.broadcast %cst_4 : f32 to vector<16x1xf32>
    %15 = arith.addf %11, %14 : vector<16x1xf32>
    %16 = math.rsqrt %15 : vector<16x1xf32>
    %17 = vector.broadcast %16 : vector<16x1xf32> to vector<16x128xf32>
    %18 = arith.mulf %13, %17 : vector<16x128xf32>
    %c0_5 = arith.constant 0 : index
    %c0_6 = arith.constant 0 : index
    %19 = vector.load %arg2[%c0_5, %c0_6] : memref<1x128xf32, #tpu.memory_space<vmem>>, vector<1x128xf32>
    %20 = vector.broadcast %19 : vector<1x128xf32> to vector<16x128xf32>
    %21 = arith.mulf %18, %20 : vector<16x128xf32>
    %c0_7 = arith.constant 0 : index
    %c0_8 = arith.constant 0 : index
    %22 = vector.load %arg3[%c0_7, %c0_8] : memref<1x128xf32, #tpu.memory_space<vmem>>, vector<1x128xf32>
    %23 = vector.broadcast %22 : vector<1x128xf32> to vector<16x128xf32>
    %24 = arith.addf %21, %23 : vector<16x128xf32>
    %25 = arith.truncf %24 : vector<16x128xf32> to vector<16x128xbf16>
    %c0_9 = arith.constant 0 : index
    %c0_10 = arith.constant 0 : index
    %26 = vector.load %arg4[%c0_9, %c0_10] : memref<128x128xbf16, #tpu.memory_space<vmem>>, vector<128x128xbf16>
    %cst_11 = arith.constant dense<0.000000e+00> : vector<16x128xf32>
    %27 = tpu.matmul %25, %26, %cst_11 {dimension_numbers = #tpu.dot_dimension_numbers<[1], [0], [0], [1], [0, 0, 1, 1], [], []>} : vector<16x128xbf16>, vector<128x128xbf16>, vector<16x128xf32> -> vector<16x128xf32>
    %c0_12 = arith.constant 0 : index
    %c0_13 = arith.constant 0 : index
    %28 = vector.load %arg5[%c0_12, %c0_13] : memref<1x128xf32, #tpu.memory_space<vmem>>, vector<1x128xf32>
    %29 = vector.broadcast %28 : vector<1x128xf32> to vector<16x128xf32>
    %30 = arith.addf %27, %29 : vector<16x128xf32>
    %cst_14 = arith.constant 0.000000e+00 : f32
    %31 = vector.broadcast %cst_14 : f32 to vector<16x128xf32>
    %32 = arith.maximumf %30, %31 : vector<16x128xf32>
    %33 = arith.truncf %32 : vector<16x128xf32> to vector<16x128xbf16>
    %c0_15 = arith.constant 0 : index
    %c0_16 = arith.constant 0 : index
    %34 = vector.load %arg6[%c0_15, %c0_16] : memref<128x128xbf16, #tpu.memory_space<vmem>>, vector<128x128xbf16>
    %cst_17 = arith.constant dense<0.000000e+00> : vector<16x128xf32>
    %35 = tpu.matmul %33, %34, %cst_17 {dimension_numbers = #tpu.dot_dimension_numbers<[1], [0], [0], [1], [0, 0, 1, 1], [], []>} : vector<16x128xbf16>, vector<128x128xbf16>, vector<16x128xf32> -> vector<16x128xf32>
    %c0_18 = arith.constant 0 : index
    %c0_19 = arith.constant 0 : index
    %36 = vector.load %arg7[%c0_18, %c0_19] : memref<1x128xf32, #tpu.memory_space<vmem>>, vector<1x128xf32>
    %37 = vector.broadcast %36 : vector<1x128xf32> to vector<16x128xf32>
    %38 = arith.addf %35, %37 : vector<16x128xf32>
    %39 = arith.addf %38, %0 : vector<16x128xf32>
    %c0_20 = arith.constant 0 : index
    %c0_21 = arith.constant 0 : index
    %40 = vector.load %arg8[%c0_20, %c0_21] : memref<16x128xf32, #tpu.memory_space<vmem>>, vector<16x128xf32>
    tpu.vector_store %arg8[%c0_20, %c0_21], %39 {strides = array<i32>} : memref<16x128xf32, #tpu.memory_space<vmem>>, vector<16x128xf32>,
    return
  }
  func.func @transform_0(%arg0: i32) -> (i32, i32) {
    %c0_i32 = arith.constant 0 : i32
    %c0_i32_0 = arith.constant 0 : i32
    return %arg0, %c0_i32 : i32, i32
  }
  func.func @transform_1(%arg0: i32) -> (i32, i32) {
    %c0_i32 = arith.constant 0 : i32
    %c0_i32_0 = arith.constant 0 : i32
    %c0_i32_1 = arith.constant 0 : i32
    return %c0_i32, %c0_i32_0 : i32, i32
  }
  func.func @transform_2(%arg0: i32) -> (i32, i32) {
    %c0_i32 = arith.constant 0 : i32
    %c0_i32_0 = arith.constant 0 : i32
    %c0_i32_1 = arith.constant 0 : i32
    return %c0_i32, %c0_i32_0 : i32, i32
  }
  func.func @transform_3(%arg0: i32) -> (i32, i32) {
    %c0_i32 = arith.constant 0 : i32
    %c0_i32_0 = arith.constant 0 : i32
    %c0_i32_1 = arith.constant 0 : i32
    return %c0_i32, %c0_i32_0 : i32, i32
  }
  func.func @transform_4(%arg0: i32) -> (i32, i32) {
    %c0_i32 = arith.constant 0 : i32
    %c0_i32_0 = arith.constant 0 : i32
    %c0_i32_1 = arith.constant 0 : i32
    return %c0_i32, %c0_i32_0 : i32, i32
  }
  func.func @transform_5(%arg0: i32) -> (i32, i32) {
    %c0_i32 = arith.constant 0 : i32
    %c0_i32_0 = arith.constant 0 : i32
    %c0_i32_1 = arith.constant 0 : i32
    return %c0_i32, %c0_i32_0 : i32, i32
  }
  func.func @transform_6(%arg0: i32) -> (i32, i32) {
    %c0_i32 = arith.constant 0 : i32
    %c0_i32_0 = arith.constant 0 : i32
    %c0_i32_1 = arith.constant 0 : i32
    return %c0_i32, %c0_i32_0 : i32, i32
  }
  func.func @transform_7(%arg0: i32) -> (i32, i32) {
    %c0_i32 = arith.constant 0 : i32
    %c0_i32_0 = arith.constant 0 : i32
    return %arg0, %c0_i32 : i32, i32
  }
}

</mosaic_0001>

<llo_original>
// kernel: tpu_custom_call.1
$region0: #{tpu_custom_call.1}
  #allocation0 [shape = 'u32[]', space=smem, size = 0x4, offset = 0x4, fixed_abs, tag = 'smem constant byte address 0x4 - core index']
  #allocation1 [shape = 'u32[144,128]{1,0:T(1,128)}', space=vmem, size = 0x12000, scoped, tag = 'internal scratch']
  %s0 = inlined_call_operand.hbm [shape: f32[16,128], index: 0, kind: input, shape index: {}]
  %s1 = inlined_call_operand.vmem [shape: f32[1,128], index: 1, kind: input, shape index: {}]
  %s2 = inlined_call_operand.vmem [shape: f32[1,128], index: 2, kind: input, shape index: {}]
  %s3 = inlined_call_operand.hbm [shape: bf16[128,128], index: 3, kind: input, shape index: {}]
  %s4 = inlined_call_operand.vmem [shape: f32[1,128], index: 4, kind: input, shape index: {}]
  %s5 = inlined_call_operand.hbm [shape: bf16[128,128], index: 5, kind: input, shape index: {}]
  %s6 = inlined_call_operand.vmem [shape: f32[1,128], index: 6, kind: input, shape index: {}]
  %s7 = inlined_call_operand.hbm [shape: f32[16,128], index: 7, kind: output, shape index: {}]
  %s8 = sld [smem:[#allocation0]]
  $region50: #{tpu_custom_call.1} parent=0
    _
  %s10 = ssub.s32 1, %s8
  %s11 = scalar_select 0, %s10, %s8
  $region1: #{tpu_custom_call.1} parent=0
    #allocation2 [shape = 'u8[8192]{0}', space=vmem, size = 0x2000, scoped, tag = 'input window, operand 0, single buffered']
    #allocation3 [shape = 's32[1]{0}', space=sflag, size = 0x4, scoped, tag = 'scoped memory for tpu_custom_call.1']
    #allocation4 [shape = 's32[1]{0}', space=sflag, size = 0x4, scoped, tag = 'scoped memory for tpu_custom_call.1']
    #allocation5 [shape = 'u8[32768]{0}', space=vmem, size = 0x8000, scoped, tag = 'input window, operand 3, single buffered']
    #allocation6 [shape = 's32[1]{0}', space=sflag, size = 0x4, scoped, tag = 'scoped memory for tpu_custom_call.1']
    #allocation7 [shape = 'u8[32768]{0}', space=vmem, size = 0x8000, scoped, tag = 'input window, operand 5, single buffered']
    #allocation8 [shape = 'u8[8192]{0}', space=vmem, size = 0x2000, scoped, tag = 'output window, operand 0, single buffered']
    %12 = vsyncpa [#allocation3], 0
    %13 = vsyncpa [#allocation6], 0
    %14 = vsyncpa [#allocation4], 0
    // Predicated region
    $region2: #{tpu_custom_call.1} parent=1 // pred_check
      _
    $region3: #{tpu_custom_call.1} parent=1 // pred_check_branch
      %16 = sbr.rel (0) target = $region5
    $region4: #{tpu_custom_call.1} parent=1 // pred_region
      %s18 = ssub.s32 256, 256
      %19 = vsyncadd [#allocation3], %s18
      %s20 = sshll.u32 [#allocation2], 4
      %s21 = int_to_ptr.vmem [resolvable:$true] %s20
      %26 = dma.hbm_to_vmem [thread:$0]  %s0, 256, %s21, [#allocation3], 128, 128, 8
    $region5: #{tpu_custom_call.1} parent=1 // pred_fallthru
      _
    // Predicated region
    $region6: #{tpu_custom_call.1} parent=1 // pred_check
      _
    $region7: #{tpu_custom_call.1} parent=1 // pred_check_branch
      %28 = sbr.rel (0) target = $region9
    $region8: #{tpu_custom_call.1} parent=1 // pred_region
      _
    $region9: #{tpu_custom_call.1} parent=1 // pred_fallthru
      _
    // Predicated region
    $region10: #{tpu_custom_call.1} parent=1 // pred_check
      _
    $region11: #{tpu_custom_call.1} parent=1 // pred_check_branch
      %30 = sbr.rel (0) target = $region13
    $region12: #{tpu_custom_call.1} parent=1 // pred_region
      _
    $region13: #{tpu_custom_call.1} parent=1 // pred_fallthru
      _
    // Predicated region
    $region14: #{tpu_custom_call.1} parent=1 // pred_check
      _
    $region15: #{tpu_custom_call.1} parent=1 // pred_check_branch
      %32 = sbr.rel (0) target = $region17
    $region16: #{tpu_custom_call.1} parent=1 // pred_region
      %s34 = ssub.s32 1024, 1024
      %35 = vsyncadd [#allocation6], %s34
      %s36 = sshll.u32 [#allocation5], 4
      %s37 = int_to_ptr.vmem [resolvable:$true] %s36
      %42 = dma.hbm_to_vmem [thread:$0]  %s3, 1024, %s37, [#allocation6], 64, 64, 4
    $region17: #{tpu_custom_call.1} parent=1 // pred_fallthru
      _
    // Predicated region
    $region18: #{tpu_custom_call.1} parent=1 // pred_check
      _
    $region19: #{tpu_custom_call.1} parent=1 // pred_check_branch
      %44 = sbr.rel (0) target = $region21
    $region20: #{tpu_custom_call.1} parent=1 // pred_region
      _
    $region21: #{tpu_custom_call.1} parent=1 // pred_fallthru
      _
    // Predicated region
    $region22: #{tpu_custom_call.1} parent=1 // pred_check
      _
    $region23: #{tpu_custom_call.1} parent=1 // pred_check_branch
      %46 = sbr.rel (0) target = $region25
    $region24: #{tpu_custom_call.1} parent=1 // pred_region
      %s48 = ssub.s32 1024, 1024
      %49 = vsyncadd [#allocation6], %s48
      %s50 = sshll.u32 [#allocation7], 4
      %s51 = int_to_ptr.vmem [resolvable:$true] %s50
      %56 = dma.hbm_to_vmem [thread:$0]  %s5, 1024, %s51, [#allocation6], 64, 64, 4
    $region25: #{tpu_custom_call.1} parent=1 // pred_fallthru
      _
    // Predicated region
    $region26: #{tpu_custom_call.1} parent=1 // pred_check
      _
    $region27: #{tpu_custom_call.1} parent=1 // pred_check_branch
      %58 = sbr.rel (0) target = $region29
    $region28: #{tpu_custom_call.1} parent=1 // pred_region
      _
    $region29: #{tpu_custom_call.1} parent=1 // pred_fallthru
      _
    // Predicated region
    $region30: #{tpu_custom_call.1} parent=1 // pred_check
      _
    $region31: #{tpu_custom_call.1} parent=1 // pred_check_branch
      %60 = sbr.rel (0) target = $region33
    $region32: #{tpu_custom_call.1} parent=1 // pred_region
      %61 = dma.done [#allocation3], 256
    $region33: #{tpu_custom_call.1} parent=1 // pred_fallthru
      _
    // Predicated region
    $region34: #{tpu_custom_call.1} parent=1 // pred_check
      _
    $region35: #{tpu_custom_call.1} parent=1 // pred_check_branch
      %63 = sbr.rel (0) target = $region37
    $region36: #{tpu_custom_call.1} parent=1 // pred_region
      %64 = dma.done [#allocation6], 1024
    $region37: #{tpu_custom_call.1} parent=1 // pred_fallthru
      _
    // Predicated region
    $region38: #{tpu_custom_call.1} parent=1 // pred_check
      _
    $region39: #{tpu_custom_call.1} parent=1 // pred_check_branch
      %66 = sbr.rel (0) target = $region41
    $region40: #{tpu_custom_call.1} parent=1 // pred_region
      %67 = dma.done [#allocation6], 1024
    $region41: #{tpu_custom_call.1} parent=1 // pred_fallthru
      _
    %v69 = vld [vmem:[#allocation2] sm:$0xff]
    %v70 = vld [vmem:[#allocation2 + $0x8] sm:$0xff]
    %71 = vadd.xlane.f32.xlu0 %v69
    %v72 = vpop.xlane.xlu0 %71
    %73 = vadd.xlane.f32.xlu0 %v70
    %v74 = vpop.xlane.xlu0 %73
    %v75 = vmul.f32 %v72, 0.03125
    %v76 = vmul.f32 %v74, 0.03125
    %v77 = vmul.f32 %v69, %v69
    %v78 = vmul.f32 %v70, %v70
    %79 = vadd.xlane.f32.xlu0 %v77
    %v80 = vpop.xlane.xlu0 %79
    %81 = vadd.xlane.f32.xlu0 %v78
    %v82 = vpop.xlane.xlu0 %81
    %v83 = vmul.f32 %v80, 0.03125
    %v84 = vmul.f32 %v82, 0.03125
    %v85 = vmul.f32 %v75, %v75
    %v86 = vmul.f32 %v76, %v76
    %v87 = vsub.f32 %v83, %v85
    %v88 = vsub.f32 %v84, %v86
    %v89 = vsub.f32 %v69, %v75
    %v90 = vsub.f32 %v70, %v76
    %v91 = vadd.f32 %v87, 1e-05
    %v92 = vadd.f32 %v88, 1e-05
    %v93 = vrsqrt.pop %v91
    %v94 = vrsqrt.pop %v92
    %v95 = vmul.f32 %v89, %v93
    %v96 = vmul.f32 %v90, %v94
    %v97 = vld [vmem:[%s1] sm:$0x1]
    %v99 = vlaneseq
    %v100 = vshrl.u32 %v99, 7
    %v101 = vsub.s32 0, %v100
    %v102 = vrot.slane %v97, %v101
    %v104 = vmul.f32 %v95, %v102
    %v105 = vmul.f32 %v96, %v102
    %v106 = vld [vmem:[%s2] sm:$0x1]
    %v108 = vlaneseq
    %v109 = vshrl.u32 %v108, 7
    %v110 = vsub.s32 0, %v109
    %v111 = vrot.slane %v106, %v110
    %v113 = vadd.f32 %v104, %v111
    %v114 = vadd.f32 %v105, %v111
    %v115 = vpack.c.bf16 %v114, %v113
    %v116 = vld [vmem:[#allocation5] sm:$0xf]
    %v117 = vld [vmem:[#allocation5 + $0x4] sm:$0xf]
    %v118 = vld [vmem:[#allocation5 + $0x8] sm:$0xf]
    %v119 = vld [vmem:[#allocation5 + $0xc] sm:$0xf]
    %v120 = vld [vmem:[#allocation5 + $0x10] sm:$0xf]
    %v121 = vld [vmem:[#allocation5 + $0x14] sm:$0xf]
    %v122 = vld [vmem:[#allocation5 + $0x18] sm:$0xf]
    %v123 = vld [vmem:[#allocation5 + $0x1c] sm:$0xf]
    %v124 = vld [vmem:[#allocation5 + $0x20] sm:$0xf]
    %v125 = vld [vmem:[#allocation5 + $0x24] sm:$0xf]
    %v126 = vld [vmem:[#allocation5 + $0x28] sm:$0xf]
    %v127 = vld [vmem:[#allocation5 + $0x2c] sm:$0xf]
    %v128 = vld [vmem:[#allocation5 + $0x30] sm:$0xf]
    %v129 = vld [vmem:[#allocation5 + $0x34] sm:$0xf]
    %v130 = vld [vmem:[#allocation5 + $0x38] sm:$0xf]
    %v131 = vld [vmem:[#allocation5 + $0x3c] sm:$0xf]
    %v132 = vld [vmem:[%s4] sm:$0x1]
    %v134 = vlaneseq
    %v135 = vshrl.u32 %v134, 7
    %v136 = vsub.s32 0, %v135
    %v137 = vrot.slane %v132, %v136
    %v155 = vunpack.c.l.b16 %v116
    %v156 = vunpack.c.l.b16 %v117
    %v157 = vunpack.c.l.b16 %v118
    %v158 = vunpack.c.l.b16 %v119
    %v159 = vunpack.c.l.b16 %v120
    %v160 = vunpack.c.l.b16 %v121
    %v161 = vunpack.c.l.b16 %v122
    %v162 = vunpack.c.l.b16 %v123
    %v163 = vunpack.c.l.b16 %v124
    %v164 = vunpack.c.l.b16 %v125
    %v165 = vunpack.c.l.b16 %v126
    %v166 = vunpack.c.l.b16 %v127
    %v167 = vunpack.c.l.b16 %v128
    %v168 = vunpack.c.l.b16 %v129
    %v169 = vunpack.c.l.b16 %v130
    %v170 = vunpack.c.l.b16 %v131
    %v171 = vpack.c.b16 %v156, %v155
    %v172 = vpack.c.b16 %v158, %v157
    %v173 = vpack.c.b16 %v160, %v159
    %v174 = vpack.c.b16 %v162, %v161
    %v175 = vpack.c.b16 %v164, %v163
    %v176 = vpack.c.b16 %v166, %v165
    %v177 = vpack.c.b16 %v168, %v167
    %v178 = vpack.c.b16 %v170, %v169
    %187 = vmatprep.subr.bf16.mxu0 0
    %188 = vmatpush1.bf16.msra.mxu0 %v171
    %189 = vmatprep.subr.bf16.mxu0 0
    %190 = vmatpush1.bf16.msra.mxu0 %v172
    %191 = vmatprep.subr.bf16.mxu0 0
    %192 = vmatpush1.bf16.msra.mxu0 %v173
    %193 = vmatprep.subr.bf16.mxu0 0
    %194 = vmatpush1.bf16.msra.mxu0 %v174
    %195 = vmatprep.subr.bf16.mxu0 0
    %196 = vmatpush1.bf16.msra.mxu0 %v175
    %197 = vmatprep.subr.bf16.mxu0 0
    %198 = vmatpush1.bf16.msra.mxu0 %v176
    %199 = vmatprep.subr.bf16.mxu0 0
    %200 = vmatpush1.bf16.msra.mxu0 %v177
    %201 = vmatprep.subr.bf16.mxu0 0
    %202 = vmatpush1.bf16.msra.mxu0 %v178
    %203 = vmatprep.subr.bf16.mxu0 0
    %204 = vmatpush1.bf16.msra.mxu0 0
    %205 = vmatprep.subr.bf16.mxu0 0
    %206 = vmatpush1.bf16.msra.mxu0 0
    %207 = vmatprep.subr.bf16.mxu0 0
    %208 = vmatpush1.bf16.msra.mxu0 0
    %209 = vmatprep.subr.bf16.mxu0 0
    %210 = vmatpush1.bf16.msra.mxu0 0
    %211 = vmatprep.subr.bf16.mxu0 0
    %212 = vmatpush1.bf16.msra.mxu0 0
    %213 = vmatprep.subr.bf16.mxu0 0
    %214 = vmatpush1.bf16.msra.mxu0 0
    %215 = vmatprep.subr.bf16.mxu0 0
    %216 = vmatpush1.bf16.msra.mxu0 0
    %217 = vmatprep.subr.bf16.mxu0 0
    %218 = vmatpush1.bf16.msra.mxu0 0
    %219 = vmatprep.mubr.bf16.mxu0 0
    %220 = vmatmul.mubr.bf16.gmra.mrb[0].mxu0 %v115
    %v221 = vpop.f32.mrb[0].mxu0
    %v222 = vadd.f32 %v137, %v221
    %v223 = vpop.f32.mrb[0].mxu0
    %v224 = vpop.f32.mrb[0].mxu0
    %v225 = vadd.f32 %v137, %v224
    %v226 = vpop.f32.mrb[0].mxu0
    %227 = vdwg.mxu0
    %v228 = vmax.f32 %v222, 0.0
    %v229 = vmax.f32 %v225, 0.0
    %v230 = vpack.c.bf16 %v229, %v228
    %v231 = vld [vmem:[#allocation7] sm:$0xf]
    %v232 = vld [vmem:[#allocation7 + $0x4] sm:$0xf]
    %v233 = vld [vmem:[#allocation7 + $0x8] sm:$0xf]
    %v234 = vld [vmem:[#allocation7 + $0xc] sm:$0xf]
    %v235 = vld [vmem:[#allocation7 + $0x10] sm:$0xf]
    %v236 = vld [vmem:[#allocation7 + $0x14] sm:$0xf]
    %v237 = vld [vmem:[#allocation7 + $0x18] sm:$0xf]
    %v238 = vld [vmem:[#allocation7 + $0x1c] sm:$0xf]
    %v239 = vld [vmem:[#allocation7 + $0x20] sm:$0xf]
    %v240 = vld [vmem:[#allocation7 + $0x24] sm:$0xf]
    %v241 = vld [vmem:[#allocation7 + $0x28] sm:$0xf]
    %v242 = vld [vmem:[#allocation7 + $0x2c] sm:$0xf]
    %v243 = vld [vmem:[#allocation7 + $0x30] sm:$0xf]
    %v244 = vld [vmem:[#allocation7 + $0x34] sm:$0xf]
    %v245 = vld [vmem:[#allocation7 + $0x38] sm:$0xf]
    %v246 = vld [vmem:[#allocation7 + $0x3c] sm:$0xf]
    %v247 = vld [vmem:[%s6] sm:$0x1]
    %v249 = vlaneseq
    %v250 = vshrl.u32 %v249, 7
    %v251 = vsub.s32 0, %v250
    %v252 = vrot.slane %v247, %v251
    %v270 = vunpack.c.l.b16 %v231
    %v271 = vunpack.c.l.b16 %v232
    %v272 = vunpack.c.l.b16 %v233
    %v273 = vunpack.c.l.b16 %v234
    %v274 = vunpack.c.l.b16 %v235
    %v275 = vunpack.c.l.b16 %v236
    %v276 = vunpack.c.l.b16 %v237
    %v277 = vunpack.c.l.b16 %v238
    %v278 = vunpack.c.l.b16 %v239
    %v279 = vunpack.c.l.b16 %v240
    %v280 = vunpack.c.l.b16 %v241
    %v281 = vunpack.c.l.b16 %v242
    %v282 = vunpack.c.l.b16 %v243
    %v283 = vunpack.c.l.b16 %v244
    %v284 = vunpack.c.l.b16 %v245
    %v285 = vunpack.c.l.b16 %v246
    %v286 = vpack.c.b16 %v271, %v270
    %v287 = vpack.c.b16 %v273, %v272
    %v288 = vpack.c.b16 %v275, %v274
    %v289 = vpack.c.b16 %v277, %v276
    %v290 = vpack.c.b16 %v279, %v278
    %v291 = vpack.c.b16 %v281, %v280
    %v292 = vpack.c.b16 %v283, %v282
    %v293 = vpack.c.b16 %v285, %v284
    %302 = vmatprep.subr.bf16.mxu0 0
    %303 = vmatpush1.bf16.msra.mxu0 %v286
    %304 = vmatprep.subr.bf16.mxu0 0
    %305 = vmatpush1.bf16.msra.mxu0 %v287
    %306 = vmatprep.subr.bf16.mxu0 0
    %307 = vmatpush1.bf16.msra.mxu0 %v288
    %308 = vmatprep.subr.bf16.mxu0 0
    %309 = vmatpush1.bf16.msra.mxu0 %v289
    %310 = vmatprep.subr.bf16.mxu0 0
    %311 = vmatpush1.bf16.msra.mxu0 %v290
    %312 = vmatprep.subr.bf16.mxu0 0
    %313 = vmatpush1.bf16.msra.mxu0 %v291
    %314 = vmatprep.subr.bf16.mxu0 0
    %315 = vmatpush1.bf16.msra.mxu0 %v292
    %316 = vmatprep.subr.bf16.mxu0 0
    %317 = vmatpush1.bf16.msra.mxu0 %v293
    %318 = vmatprep.subr.bf16.mxu0 0
    %319 = vmatpush1.bf16.msra.mxu0 0
    %320 = vmatprep.subr.bf16.mxu0 0
    %321 = vmatpush1.bf16.msra.mxu0 0
    %322 = vmatprep.subr.bf16.mxu0 0
    %323 = vmatpush1.bf16.msra.mxu0 0
    %324 = vmatprep.subr.bf16.mxu0 0
    %325 = vmatpush1.bf16.msra.mxu0 0
    %326 = vmatprep.subr.bf16.mxu0 0
    %327 = vmatpush1.bf16.msra.mxu0 0
    %328 = vmatprep.subr.bf16.mxu0 0
    %329 = vmatpush1.bf16.msra.mxu0 0
    %330 = vmatprep.subr.bf16.mxu0 0
    %331 = vmatpush1.bf16.msra.mxu0 0
    %332 = vmatprep.subr.bf16.mxu0 0
    %333 = vmatpush1.bf16.msra.mxu0 0
    %334 = vmatprep.mubr.bf16.mxu0 0
    %335 = vmatmul.mubr.bf16.gmra.mrb[0].mxu0 %v230
    %v336 = vpop.f32.mrb[0].mxu0
    %v337 = vadd.f32 %v252, %v336
    %v338 = vpop.f32.mrb[0].mxu0
    %v339 = vpop.f32.mrb[0].mxu0
    %v340 = vadd.f32 %v252, %v339
    %v341 = vpop.f32.mrb[0].mxu0
    %342 = vdwg.mxu0
    %v343 = vadd.f32 %v337, %v69
    %v344 = vadd.f32 %v340, %v70
    %345 = vst [vmem:[#allocation8] sm:$0xff] %v343
    %346 = vst [vmem:[#allocation8 + $0x8] sm:$0xff] %v344
    // Predicated region
    $region42: #{tpu_custom_call.1} parent=1 // pred_check
      _
    $region43: #{tpu_custom_call.1} parent=1 // pred_check_branch
      %348 = sbr.rel (0) target = $region45
    $region44: #{tpu_custom_call.1} parent=1 // pred_region
      %s350 = ssub.s32 256, 256
      %351 = vsyncadd [#allocation4], %s350
      %s352 = sshll.u32 [#allocation8], 4
      %s353 = int_to_ptr.vmem [resolvable:$true] %s352
      %358 = dma.vmem_to_hbm [thread:$0]  %s353, 256, %s7, [#allocation4], 128, 128, 8
    $region45: #{tpu_custom_call.1} parent=1 // pred_fallthru
      _
    // Predicated region
    $region46: #{tpu_custom_call.1} parent=1 // pred_check
      _
    $region47: #{tpu_custom_call.1} parent=1 // pred_check_branch
      %360 = sbr.rel (0) target = $region49
    $region48: #{tpu_custom_call.1} parent=1 // pred_region
      %361 = dma.done [#allocation4], 256
    $region49: #{tpu_custom_call.1} parent=1 // pred_fallthru
      _
    %362 = vsyncpa [#allocation3], 1
    %363 = vsyncpa [#allocation6], 1
    %364 = vsyncpa [#allocation4], 1

</llo_original>
